<compile_context>
chip_gen: v5e
topology: v5e:2x2
jax: 0.10.0
libtpu: 0.0.40
codegen_flags: <defaults>
</compile_context>

<pallas_src>
from typing import NamedTuple

import numpy as np
import jax
import jax.numpy as jnp
from jax.experimental import pallas as pl
from jax.experimental.pallas import tpu as pltpu


def _round_up(x, m):
    return ((x + m - 1) // m) * m


# Generation-safe tile caps: multiples of 256 (v6e/v7x MXU), VMEM-bounded even
# on v7x (64 MiB physical).  v5e/v6e (128 MiB VMEM) could go larger; 512 is a
# safe default for all three generations at these problem sizes.
_MAX_TM = 256
_MAX_TK = 512
_MAX_TN = 512
_X_RESIDENT_BYTES = 4 << 20  # keep the whole batch resident in VMEM if <= 4 MiB


def radon_projection_matrix(grid_size, theta_deg):
    """Dense linear operator equivalent to: per-angle affine_grid(R) +
    grid_sample(mode='bilinear', padding_mode='zeros', align_corners=False)
    + sum over rows (dim 2).  Returns numpy float64 of shape (W*W, W*A);
    column index = w_out * num_angles + angle."""
    W = int(grid_size)
    A = len(theta_deg)
    # normalized output coords, align_corners=False convention of affine_grid
    c = (2.0 * np.arange(W, dtype=np.float64) + 1.0) / W - 1.0
    y_out = c[:, None]                     # varies along h_out (rows)
    x_out = c[None, :]                     # varies along w_out (cols)
    out_col_w = np.broadcast_to(np.arange(W)[None, :], (W, W))  # w_out index
    P = np.zeros((W * W, W * A), dtype=np.float64)
    for a, t_deg in enumerate(np.asarray(theta_deg, dtype=np.float64)):
        t = np.deg2rad(t_deg)
        ct, st = np.cos(t), np.sin(t)
        gx = ct * x_out + st * y_out       # sampling x (width) coord in [-1, 1]
        gy = -st * x_out + ct * y_out      # sampling y (height) coord
        # grid_sample unnormalization (align_corners=False)
        ix = ((gx + 1.0) * W - 1.0) / 2.0
        iy = ((gy + 1.0) * W - 1.0) / 2.0
        ix0 = np.floor(ix).astype(np.int64)
        iy0 = np.floor(iy).astype(np.int64)
        wx1 = ix - ix0
        wy1 = iy - iy0
        for dy, wy in ((0, 1.0 - wy1), (1, wy1)):
            for dx, wx in ((0, 1.0 - wx1), (1, wx1)):
                xi = ix0 + dx
                yi = iy0 + dy
                valid = (xi >= 0) & (xi < W) & (yi >= 0) & (yi < W)
                w = wx * wy * valid        # zeros padding: invalid taps weight 0
                in_row = np.clip(yi, 0, W - 1) * W + np.clip(xi, 0, W - 1)
                out_col = out_col_w * A + a
                np.add.at(P, (in_row.ravel(), out_col.ravel()), w.ravel())
    return P


class RadonOperator(NamedTuple):
    """One-time-prepared projection operator (cast + padded exactly once)."""
    P_padded: jax.Array   # (Kp, Np) bf16, zero-padded, ready to stream
    grid_size: int        # W
    num_theta: int        # A
    K: int                # W*W
    Nout: int             # W*A
    Kp: int
    Np: int
    tk: int
    tn: int


def prepare_radon(grid_size, theta_deg, dtype=jnp.bfloat16):
    """Build P, choose K/N tiles, cast + zero-pad ONCE (hoisted out of the
    per-call forward path -- the hot path then only streams this operand)."""
    W = int(grid_size)
    A = len(theta_deg)
    P = radon_projection_matrix(W, theta_deg)       # (K, Nout) float64
    K, Nout = P.shape

    tk = min(_MAX_TK, _round_up(K, 128))
    Kp = _round_up(K, tk)
    tn = min(_MAX_TN, _round_up(Nout, 128))
    Np = _round_up(Nout, tn)
    # Best effort: >= 2 blocks along the parallel j axis so both v7x
    # TensorCores get work (single extra grid step on 1-TC chips, negligible).
    if Np // tn < 2 and tn >= 256 and tn % 256 == 0:
        tn //= 2

    Pp = np.zeros((Kp, Np), dtype=np.float32)
    Pp[:K, :Nout] = P
    return RadonOperator(jnp.asarray(Pp, dtype=dtype), W, A, K, Nout, Kp, Np, tk, tn)


def _resident_kernel(x_ref, p_ref, o_ref, acc_ref):
    """2-D grid (j, k).  Whole padded batch X is VMEM-resident as
    (Kk, Mp, tk) with a constant block index (DMA'd once); P blocks stream
    exactly once; f32 accumulation over k on the MXU."""
    k = pl.program_id(1)

    @pl.when(k == 0)
    def _():
        acc_ref[...] = jnp.zeros_like(acc_ref)

    acc_ref[...] += jnp.dot(x_ref[k], p_ref[...],
                            preferred_element_type=jnp.float32)

    @pl.when(k == pl.num_programs(1) - 1)
    def _():
        o_ref[...] = acc_ref[...].astype(o_ref.dtype)


def _tiled_kernel(x_ref, p_ref, o_ref, acc_ref):
    """3-D grid (i, j, k) fallback for genuinely large batches."""
    k = pl.program_id(2)

    @pl.when(k == 0)
    def _():
        acc_ref[...] = jnp.zeros_like(acc_ref)

    acc_ref[...] += jnp.dot(x_ref[...], p_ref[...],
                            preferred_element_type=jnp.float32)

    @pl.when(k == pl.num_programs(2) - 1)
    def _():
        o_ref[...] = acc_ref[...].astype(o_ref.dtype)


def radon_forward(x, op: RadonOperator):
    """x: (N, C, H, W), W == H == op.grid_size.
    Returns (N, C, W, num_theta) float32 matching torch out[n, c, w_out, angle]."""
    N, C, H, W = x.shape
    assert H == W == op.grid_size
    A = op.num_theta
    K, Nout, Kp, Np, tk, tn = op.K, op.Nout, op.Kp, op.Np, op.tk, op.tn

    M = N * C
    Mp = _round_up(M, 16)            # bf16 packs 2 rows per sublane -> granule 16
    tm = min(_MAX_TM, Mp)
    Mp = _round_up(Mp, tm)

    elt = jnp.dtype(op.P_padded.dtype).itemsize
    x_flat = x.reshape(M, K).astype(op.P_padded.dtype)
    if (Mp, Kp) != (M, K):
        x_flat = jnp.pad(x_flat, ((0, Mp - M), (0, Kp - K)))

    J = Np // tn
    Kk = Kp // tk

    resident = (Mp == tm) and (Mp * Kp * elt <= _X_RESIDENT_BYTES)

    if resident:
        # X as (Kk, Mp, tk), constant block index -> fetched once, sliced by k
        # inside the kernel; P streamed exactly once over the (j, k) grid.
        x_in = x_flat.reshape(Mp, Kk, tk).transpose(1, 0, 2)
        grid = (J, Kk)
        kernel = _resident_kernel
        in_specs = [
            pl.BlockSpec((Kk, Mp, tk), lambda j, k: (0, 0, 0)),
            pl.BlockSpec((tk, tn), lambda j, k: (k, j)),
        ]
        out_spec = pl.BlockSpec((tm, tn), lambda j, k: (0, j))
        dims = ("parallel", "arbitrary")
        bytes_accessed = (Mp * Kp + Kp * Np) * elt + Mp * Np * 4
        vmem_need = 2 * (Kk * Mp * tk * elt + tk * tn * elt + tm * tn * 4) + tm * tn * 4
    else:
        x_in = x_flat
        grid = (Mp // tm, J, Kk)
        kernel = _tiled_kernel
        in_specs = [
            pl.BlockSpec((tm, tk), lambda i, j, k: (i, k)),
            pl.BlockSpec((tk, tn), lambda i, j, k: (k, j)),
        ]
        out_spec = pl.BlockSpec((tm, tn), lambda i, j, k: (i, j))
        dims = ("parallel", "parallel", "arbitrary")
        # X re-streamed per j block, P re-streamed per i block.
        bytes_accessed = Mp * Kp * elt * J + Kp * Np * elt * (Mp // tm) + Mp * Np * 4
        vmem_need = 2 * (tm * tk * elt + tk * tn * elt + tm * tn * 4) + tm * tn * 4

    cost = pl.CostEstimate(
        flops=2 * Mp * Kp * Np,
        transcendentals=0,
        bytes_accessed=int(bytes_accessed),
    )
    # 40 MiB cap keeps headroom on v7x's 64 MiB physical VMEM.
    vmem_limit = int(min(max(2 * vmem_need, 8 << 20), 40 << 20))

    out_flat = pl.pallas_call(
        kernel,
        out_shape=jax.ShapeDtypeStruct((Mp, Np), jnp.float32),
        grid_spec=pltpu.PrefetchScalarGridSpec(
            num_scalar_prefetch=0,
            grid=grid,
            in_specs=in_specs,
            out_specs=out_spec,
            scratch_shapes=[pltpu.VMEM((tm, tn), jnp.float32)],
        ),
        compiler_params=pltpu.CompilerParams(
            dimension_semantics=dims,
            vmem_limit_bytes=vmem_limit,
        ),
        cost_estimate=cost,
    )(x_in, op.P_padded)

    if (Mp, Np) != (M, Nout):        # skip the slice copy when unpadded
        out_flat = out_flat[:M, :Nout]
    return out_flat.reshape(N, C, W, A)


if __name__ == "__main__":
    # small shapes consistent with the module's forward: (N, C, W, H), W == H
    N, C, W = 2, 4, 16
    num_proj = 8
    theta = np.linspace(0.0, 180.0, num_proj, endpoint=False)

    key = jax.random.PRNGKey(0)
    x = jax.random.normal(key, (N, C, W, W), dtype=jnp.float32)

    # one-time setup: P built, cast to bf16 and padded exactly once
    op = prepare_radon(W, theta)
    radon_fn = jax.jit(lambda xx: radon_forward(xx, op))

    out = jax.block_until_ready(radon_fn(x))
    assert out.shape == (N, C, W, num_proj), out.shape

    # sanity check: Pallas kernel vs the same bf16-operand / f32-accumulation
    # linear operator in plain JAX.
    ref = jnp.dot(
        x.reshape(N * C, W * W).astype(jnp.bfloat16),
        op.P_padded[:op.K, :op.Nout],
        preferred_element_type=jnp.float32,
    ).reshape(N, C, W, num_proj)
    assert jnp.allclose(out, ref, atol=1e-2, rtol=1e-2)

    print("KERNEL_OK")
</pallas_src>

<mosaic_0001>
module attributes {stable_mosaic.version = 11 : i64} {
  func.func @_resident_kernel(%arg0: i32, %arg1: i32, %arg2: memref<1x16x256xbf16, #tpu.memory_space<vmem>>, %arg3: memref<256x128xbf16, #tpu.memory_space<vmem>>, %arg4: memref<16x128xf32, #tpu.memory_space<vmem>>, %arg5: memref<16x128xf32, #tpu.memory_space<vmem>>) attributes {dimension_semantics = [#tpu.dimension_semantics<parallel>, #tpu.dimension_semantics<arbitrary>], iteration_bounds = array<i64: 1, 1>, scalar_prefetch = 0 : i64, scratch_operands = 1 : i64, tpu.core_type = #tpu.core_type<tc>, window_params = [{pipeline_mode = #tpu.pipeline_mode<synchronous>, transform_indices = @transform_0, window_bounds = array<i64: 1, 16, 256>}, {transform_indices = @transform_1, window_bounds = array<i64: 256, 128>}, {transform_indices = @transform_2, window_bounds = array<i64: 16, 128>}]} {
    %c0_i32 = arith.constant 0 : i32
    %0 = arith.cmpi eq, %arg1, %c0_i32 : i32
    %1 = arith.extui %0 : i1 to i32
    %c0_i32_0 = arith.constant 0 : i32
    %2 = arith.cmpi ne, %1, %c0_i32_0 : i32
    scf.if %2 {
      %cst_10 = arith.constant 0.000000e+00 : f32
      %14 = vector.broadcast %cst_10 : f32 to vector<16x128xf32>
      %c0_11 = arith.constant 0 : index
      %c0_12 = arith.constant 0 : index
      %15 = vector.load %arg5[%c0_11, %c0_12] : memref<16x128xf32, #tpu.memory_space<vmem>>, vector<16x128xf32>
      tpu.vector_store %arg5[%c0_11, %c0_12], %14 {strides = array<i32>} : memref<16x128xf32, #tpu.memory_space<vmem>>, vector<16x128xf32>,
    } else {
    }
    %c0 = arith.constant 0 : index
    %c0_1 = arith.constant 0 : index
    %3 = vector.load %arg5[%c0, %c0_1] : memref<16x128xf32, #tpu.memory_space<vmem>>, vector<16x128xf32>
    %4 = arith.index_cast %arg1 : i32 to index
    %c0_2 = arith.constant 0 : index
    %c0_3 = arith.constant 0 : index
    %5 = vector.load %arg2[%4, %c0_2, %c0_3] : memref<1x16x256xbf16, #tpu.memory_space<vmem>>, vector<1x16x256xbf16>
    %6 = vector.shape_cast %5 : vector<1x16x256xbf16> to vector<16x256xbf16>
    %c0_4 = arith.constant 0 : index
    %c0_5 = arith.constant 0 : index
    %7 = vector.load %arg3[%c0_4, %c0_5] : memref<256x128xbf16, #tpu.memory_space<vmem>>, vector<256x128xbf16>
    %cst = arith.constant dense<0.000000e+00> : vector<16x128xf32>
    %8 = tpu.matmul %6, %7, %cst {dimension_numbers = #tpu.dot_dimension_numbers<[1], [0], [0], [1], [0, 0, 1, 1], [], []>} : vector<16x256xbf16>, vector<256x128xbf16>, vector<16x128xf32> -> vector<16x128xf32>
    %9 = arith.addf %3, %8 : vector<16x128xf32>
    %c0_6 = arith.constant 0 : index
    %c0_7 = arith.constant 0 : index
    %10 = vector.load %arg5[%c0_6, %c0_7] : memref<16x128xf32, #tpu.memory_space<vmem>>, vector<16x128xf32>
    tpu.vector_store %arg5[%c0_6, %c0_7], %9 {strides = array<i32>} : memref<16x128xf32, #tpu.memory_space<vmem>>, vector<16x128xf32>,
    %c0_i32_8 = arith.constant 0 : i32
    %11 = arith.cmpi eq, %arg1, %c0_i32_8 : i32
    %12 = arith.extui %11 : i1 to i32
    %c0_i32_9 = arith.constant 0 : i32
    %13 = arith.cmpi ne, %12, %c0_i32_9 : i32
    scf.if %13 {
      %c0_10 = arith.constant 0 : index
      %c0_11 = arith.constant 0 : index
      %14 = vector.load %arg5[%c0_10, %c0_11] : memref<16x128xf32, #tpu.memory_space<vmem>>, vector<16x128xf32>
      %c0_12 = arith.constant 0 : index
      %c0_13 = arith.constant 0 : index
      %15 = vector.load %arg4[%c0_12, %c0_13] : memref<16x128xf32, #tpu.memory_space<vmem>>, vector<16x128xf32>
      tpu.vector_store %arg4[%c0_12, %c0_13], %14 {strides = array<i32>} : memref<16x128xf32, #tpu.memory_space<vmem>>, vector<16x128xf32>,
    } else {
    }
    return
  }
  func.func @transform_0(%arg0: i32, %arg1: i32) -> (i32, i32, i32) {
    %c0_i32 = arith.constant 0 : i32
    %c0_i32_0 = arith.constant 0 : i32
    %c0_i32_1 = arith.constant 0 : i32
    %c0_i32_2 = arith.constant 0 : i32
    return %c0_i32, %c0_i32_0, %c0_i32_1 : i32, i32, i32
  }
  func.func @transform_1(%arg0: i32, %arg1: i32) -> (i32, i32) {
    %c0_i32 = arith.constant 0 : i32
    return %arg1, %arg0 : i32, i32
  }
  func.func @transform_2(%arg0: i32, %arg1: i32) -> (i32, i32) {
    %c0_i32 = arith.constant 0 : i32
    %c0_i32_0 = arith.constant 0 : i32
    return %c0_i32, %arg0 : i32, i32
  }
}

</mosaic_0001>

<llo_original>
// kernel: _lambda_.1
$region0: #{_lambda_.1}
  #allocation0 [shape = 'u32[]', space=smem, size = 0x4, offset = 0x4, fixed_abs, tag = 'smem constant byte address 0x4 - core index']
  #allocation1 [shape = 'u32[72,128]{1,0:T(1,128)}', space=vmem, size = 0x9000, scoped, tag = 'internal scratch']
  #allocation2 [shape = 'f32[16,128]{1,0:T(8,128)}', space=vmem, size = 0x2000, scoped, tag = 'scratch operand']
  %s0 = inlined_call_operand.vmem [shape: bf16[1,16,256], index: 0, kind: input, shape index: {}]
  %s1 = inlined_call_operand.vmem [shape: bf16[256,128], index: 1, kind: input, shape index: {}]
  %s2 = inlined_call_operand.vmem [shape: f32[16,128], index: 2, kind: output, shape index: {}]
  %s3 = sld [smem:[#allocation0]]
  $region26: #{_lambda_.1} parent=0
    _
  %s5 = ssub.s32 1, %s3
  %s6 = scalar_select 0, %s5, %s3
  // Predicated region
  $region2: #{_lambda_.1} parent=0 // pred_check
    _
  $region3: #{_lambda_.1} parent=0 // pred_check_branch
    %8 = sbr.rel (0) target = $region5
  $region4: #{_lambda_.1} parent=0 // pred_region
    _
  $region5: #{_lambda_.1} parent=0 // pred_fallthru
    _
  // Predicated region
  $region6: #{_lambda_.1} parent=0 // pred_check
    _
  $region7: #{_lambda_.1} parent=0 // pred_check_branch
    %10 = sbr.rel (0) target = $region9
  $region8: #{_lambda_.1} parent=0 // pred_region
    _
  $region9: #{_lambda_.1} parent=0 // pred_fallthru
    _
  %p11 = scmp.eq.s32.totalorder 0, 0
  // Predicated region
  $region10: #{_lambda_.1} parent=0 // pred_check
    %p12 = pneg %p11
  $region11: #{_lambda_.1} parent=0 // pred_check_branch
    %14 = sbr.rel (%p12) target = $region13
  $region12: #{_lambda_.1} parent=0 // pred_region
    %15 = vst [vmem:[#allocation2] sm:$0xff] 0.0
    %16 = vst [vmem:[#allocation2 + $0x8] sm:$0xff] 0.0
  $region13: #{_lambda_.1} parent=0 // pred_fallthru
    _
  %v17 = vld [vmem:[#allocation2] sm:$0xff]
  %v18 = vld [vmem:[#allocation2 + $0x8] sm:$0xff]
  %s19 = smul.u32 0, 4
  %s20 = smul.addr %s19, 4
  %s21 = scalar_lea.vmem %s0, %s20
  %v22 = vld [vmem:[%s21] sm:$0xff]
  %v23 = vld [vmem:[%s21 + $0x8] sm:$0xff]
  %v24 = vld [vmem:[%s1] sm:$0xf]
  %v25 = vld [vmem:[%s1 + $0x4] sm:$0xf]
  %v26 = vld [vmem:[%s1 + $0x8] sm:$0xf]
  %v27 = vld [vmem:[%s1 + $0xc] sm:$0xf]
  %v28 = vld [vmem:[%s1 + $0x10] sm:$0xf]
  %v29 = vld [vmem:[%s1 + $0x14] sm:$0xf]
  %v30 = vld [vmem:[%s1 + $0x18] sm:$0xf]
  %v31 = vld [vmem:[%s1 + $0x1c] sm:$0xf]
  %v32 = vld [vmem:[%s1 + $0x20] sm:$0xf]
  %v33 = vld [vmem:[%s1 + $0x24] sm:$0xf]
  %v34 = vld [vmem:[%s1 + $0x28] sm:$0xf]
  %v35 = vld [vmem:[%s1 + $0x2c] sm:$0xf]
  %v36 = vld [vmem:[%s1 + $0x30] sm:$0xf]
  %v37 = vld [vmem:[%s1 + $0x34] sm:$0xf]
  %v38 = vld [vmem:[%s1 + $0x38] sm:$0xf]
  %v39 = vld [vmem:[%s1 + $0x3c] sm:$0xf]
  %v40 = vld [vmem:[%s1 + $0x40] sm:$0xf]
  %v41 = vld [vmem:[%s1 + $0x44] sm:$0xf]
  %v42 = vld [vmem:[%s1 + $0x48] sm:$0xf]
  %v43 = vld [vmem:[%s1 + $0x4c] sm:$0xf]
  %v44 = vld [vmem:[%s1 + $0x50] sm:$0xf]
  %v45 = vld [vmem:[%s1 + $0x54] sm:$0xf]
  %v46 = vld [vmem:[%s1 + $0x58] sm:$0xf]
  %v47 = vld [vmem:[%s1 + $0x5c] sm:$0xf]
  %v48 = vld [vmem:[%s1 + $0x60] sm:$0xf]
  %v49 = vld [vmem:[%s1 + $0x64] sm:$0xf]
  %v50 = vld [vmem:[%s1 + $0x68] sm:$0xf]
  %v51 = vld [vmem:[%s1 + $0x6c] sm:$0xf]
  %v52 = vld [vmem:[%s1 + $0x70] sm:$0xf]
  %v53 = vld [vmem:[%s1 + $0x74] sm:$0xf]
  %v54 = vld [vmem:[%s1 + $0x78] sm:$0xf]
  %v55 = vld [vmem:[%s1 + $0x7c] sm:$0xf]
  %v58 = vunpack.c.l.b16 %v22
  %v59 = vunpack.c.h.b16 %v22
  %v60 = vunpack.c.l.b16 %v23
  %v61 = vunpack.c.h.b16 %v23
  %v62 = vpack.c.b16 %v60, %v58
  %v63 = vpack.c.b16 %v61, %v59
  %v98 = vunpack.c.l.b16 %v24
  %v99 = vunpack.c.l.b16 %v25
  %v100 = vunpack.c.l.b16 %v26
  %v101 = vunpack.c.l.b16 %v27
  %v102 = vunpack.c.l.b16 %v28
  %v103 = vunpack.c.l.b16 %v29
  %v104 = vunpack.c.l.b16 %v30
  %v105 = vunpack.c.l.b16 %v31
  %v106 = vunpack.c.l.b16 %v32
  %v107 = vunpack.c.l.b16 %v33
  %v108 = vunpack.c.l.b16 %v34
  %v109 = vunpack.c.l.b16 %v35
  %v110 = vunpack.c.l.b16 %v36
  %v111 = vunpack.c.l.b16 %v37
  %v112 = vunpack.c.l.b16 %v38
  %v113 = vunpack.c.l.b16 %v39
  %v114 = vunpack.c.l.b16 %v40
  %v115 = vunpack.c.l.b16 %v41
  %v116 = vunpack.c.l.b16 %v42
  %v117 = vunpack.c.l.b16 %v43
  %v118 = vunpack.c.l.b16 %v44
  %v119 = vunpack.c.l.b16 %v45
  %v120 = vunpack.c.l.b16 %v46
  %v121 = vunpack.c.l.b16 %v47
  %v122 = vunpack.c.l.b16 %v48
  %v123 = vunpack.c.l.b16 %v49
  %v124 = vunpack.c.l.b16 %v50
  %v125 = vunpack.c.l.b16 %v51
  %v126 = vunpack.c.l.b16 %v52
  %v127 = vunpack.c.l.b16 %v53
  %v128 = vunpack.c.l.b16 %v54
  %v129 = vunpack.c.l.b16 %v55
  %v130 = vpack.c.b16 %v99, %v98
  %v131 = vpack.c.b16 %v101, %v100
  %v132 = vpack.c.b16 %v103, %v102
  %v133 = vpack.c.b16 %v105, %v104
  %v134 = vpack.c.b16 %v107, %v106
  %v135 = vpack.c.b16 %v109, %v108
  %v136 = vpack.c.b16 %v111, %v110
  %v137 = vpack.c.b16 %v113, %v112
  %v138 = vpack.c.b16 %v115, %v114
  %v139 = vpack.c.b16 %v117, %v116
  %v140 = vpack.c.b16 %v119, %v118
  %v141 = vpack.c.b16 %v121, %v120
  %v142 = vpack.c.b16 %v123, %v122
  %v143 = vpack.c.b16 %v125, %v124
  %v144 = vpack.c.b16 %v127, %v126
  %v145 = vpack.c.b16 %v129, %v128
  %162 = vmatpush.bf16.msra.mxu0 %v137
  %163 = vmatpush.bf16.msra.mxu0 %v136
  %164 = vmatpush.bf16.msra.mxu0 %v135
  %165 = vmatpush.bf16.msra.mxu0 %v134
  %166 = vmatpush.bf16.msra.mxu0 %v133
  %167 = vmatpush.bf16.msra.mxu0 %v132
  %168 = vmatpush.bf16.msra.mxu0 %v131
  %169 = vmatpush.bf16.msra.mxu0 %v130
  %170 = vmatmul.bf16.gmra.mxu0 %v62
  %v171 = vpop.f32.mrf.mxu0
  %v172 = vadd.f32 0.0, %v171
  %v173 = vpop.f32.mrf.mxu0
  %v174 = vadd.f32 0.0, %v173
  %175 = vdwg.mxu0
  %176 = vmatpush.bf16.msra.mxu0 %v145
  %177 = vmatpush.bf16.msra.mxu0 %v144
  %178 = vmatpush.bf16.msra.mxu0 %v143
  %179 = vmatpush.bf16.msra.mxu0 %v142
  %180 = vmatpush.bf16.msra.mxu0 %v141
  %181 = vmatpush.bf16.msra.mxu0 %v140
  %182 = vmatpush.bf16.msra.mxu0 %v139
  %183 = vmatpush.bf16.msra.mxu0 %v138
  %184 = vmatmul.bf16.gmra.mxu0 %v63
  %v185 = vpop.f32.mrf.mxu0
  %v186 = vadd.f32 %v172, %v185
  %v187 = vpop.f32.mrf.mxu0
  %v188 = vadd.f32 %v174, %v187
  %189 = vdwg.mxu0
  %v190 = vadd.f32 %v17, %v186
  %v191 = vadd.f32 %v18, %v188
  %192 = vst [vmem:[#allocation2] sm:$0xff] %v190
  %193 = vst [vmem:[#allocation2 + $0x8] sm:$0xff] %v191
  // Predicated region
  $region14: #{_lambda_.1} parent=0 // pred_check
    %p194 = pneg %p11
  $region15: #{_lambda_.1} parent=0 // pred_check_branch
    %196 = sbr.rel (%p194) target = $region17
  $region16: #{_lambda_.1} parent=0 // pred_region
    %v197 = vld [vmem:[#allocation2] sm:$0xff]
    %v198 = vld [vmem:[#allocation2 + $0x8] sm:$0xff]
    %199 = vst [vmem:[%s2] sm:$0xff] %v197
    %200 = vst [vmem:[%s2 + $0x8] sm:$0xff] %v198
  $region17: #{_lambda_.1} parent=0 // pred_fallthru
    _
  // Predicated region
  $region18: #{_lambda_.1} parent=0 // pred_check
    _
  $region19: #{_lambda_.1} parent=0 // pred_check_branch
    %202 = sbr.rel (0) target = $region21
  $region20: #{_lambda_.1} parent=0 // pred_region
    _
  $region21: #{_lambda_.1} parent=0 // pred_fallthru
    _
  // Predicated region
  $region22: #{_lambda_.1} parent=0 // pred_check
    _
  $region23: #{_lambda_.1} parent=0 // pred_check_branch
    %204 = sbr.rel (0) target = $region25
  $region24: #{_lambda_.1} parent=0 // pred_region
    _
  $region25: #{_lambda_.1} parent=0 // pred_fallthru
    _

</llo_original>
